<compile_context>
chip_gen: v7x
topology: tpu7x:2x2x1
jax: 0.10.0
libtpu: 0.0.40
codegen_flags: <defaults>
</compile_context>

<pallas_src>
import numpy as np
import jax
import jax.numpy as jnp
from jax.experimental import pallas as pl
from jax.experimental.pallas import tpu as pltpu


def _cdiv(a, b):
    return -(-a // b)


_LANE = 128


def _padded_area(r, c, sub):
    return (_cdiv(r, sub) * sub) * (_cdiv(c, _LANE) * _LANE)


def _pick_view(shape, sub, budget_elems):
    """Pick a copy-free (rows, cols) view of the contiguous buffer that
    minimizes (sub, 128) tile padding while keeping a minimal row-block
    within the VMEM element budget."""
    n = 1
    for d in shape:
        n *= int(d)
    if len(shape) < 2:
        return (1, max(n, 1))
    cands = []
    lead = 1
    for i in range(1, len(shape)):
        lead *= int(shape[i - 1])
        cands.append((lead, n // lead))
    cands.sort(key=lambda rc: _padded_area(rc[0], rc[1], sub))
    for r, c in cands:
        if min(r, sub) * c <= budget_elems:
            return (r, c)
    # Nothing fits the budget cleanly: take the finest-grained rows.
    return max(cands, key=lambda rc: rc[0])


def _make_l1_kernel(n_rows, row_block):
    """Stream |b - a| into a resident f32 accumulator; finalize to a scalar."""

    def kernel(a_ref, b_ref, out_ref, acc_ref):
        s = pl.program_id(0)

        @pl.when(s == 0)
        def _init():
            acc_ref[...] = jnp.zeros_like(acc_ref)

        # bf16 inputs: native bf16 sub/abs, upcast only for the f32 accumulate.
        diff = jnp.abs(b_ref[...] - a_ref[...]).astype(jnp.float32)

        rows_left = n_rows - s * row_block

        @pl.when(rows_left >= row_block)
        def _full_block():
            # Steady-state fast path: pure VPU add, no mask work.
            acc_ref[...] += diff

        @pl.when(rows_left < row_block)
        def _ragged_block():
            # Last (ragged) block only: rows past the true row count hold
            # garbage from the edge DMA -> mask them to zero before adding.
            row_ids = jax.lax.broadcasted_iota(jnp.int32, diff.shape, 0)
            acc_ref[...] += jnp.where(row_ids < rows_left, diff, 0.0)

        @pl.when(s == pl.num_programs(0) - 1)
        def _finalize():
            per_row = jnp.sum(acc_ref[...], axis=1, keepdims=True)   # (rb, 1)
            out_ref[...] = jnp.sum(per_row, axis=0, keepdims=True)   # (1, 1)

    return kernel


def _mel_l1_impl(spec, output_spec):
    dtype = jnp.promote_types(spec.dtype, output_spec.dtype)
    spec = spec.astype(dtype)
    output_spec = output_spec.astype(dtype)

    shape = spec.shape
    N = int(np.prod(shape))
    in_item = int(jnp.dtype(dtype).itemsize)

    # Pipeline footprint per element: 2 inputs x 2 buffers x itemsize + f32 acc.
    per_elem_bytes = 4 * in_item + 4
    budget_bytes = 24 << 20                       # fits every gen's VMEM easily
    blk_elems = budget_bytes // per_elem_bytes
    blk_elems = min(blk_elems, (4 << 20) // in_item)   # <= ~4 MiB / input block
    blk_elems = max(blk_elems, 1)

    sub = 16 if in_item == 2 else 8               # bf16 packs [16,128] tiles

    R, C = _pick_view(shape, sub, blk_elems)      # free reshape, no copy
    a = spec.reshape(R, C)
    b = output_spec.reshape(R, C)

    rb = (blk_elems // C) // sub * sub
    if rb < sub:
        rb = sub
    if rb >= R:
        rb = R                                    # single block, no ragged edge
    S = _cdiv(R, rb)

    footprint = per_elem_bytes * rb * C + (1 << 16)
    vmem_limit = int(min(48 << 20, max(footprint + (2 << 20), 8 << 20)))

    kernel = _make_l1_kernel(R, rb)

    partial = pl.pallas_call(
        kernel,
        out_shape=jax.ShapeDtypeStruct((1, 1), jnp.float32),
        grid_spec=pltpu.PrefetchScalarGridSpec(
            num_scalar_prefetch=0,
            grid=(S,),
            in_specs=[
                pl.BlockSpec((rb, C), lambda s: (s, 0)),
                pl.BlockSpec((rb, C), lambda s: (s, 0)),
            ],
            out_specs=pl.BlockSpec((1, 1), lambda s: (0, 0)),
            scratch_shapes=[pltpu.VMEM((rb, C), jnp.float32)],
        ),
        compiler_params=pltpu.CompilerParams(
            dimension_semantics=("arbitrary",),
            vmem_limit_bytes=vmem_limit,
        ),
        cost_estimate=pl.CostEstimate(
            flops=3 * N,
            transcendentals=0,
            bytes_accessed=2 * N * in_item + 4,
        ),
    )(a, b)

    return partial[0, 0] / N


_mel_l1 = jax.jit(_mel_l1_impl)


def mel_spectrogram_loss(spec, spec_length, output_spec, output_spec_length,
                         check_lengths=True, **batch):
    """Pallas equivalent of MelSpectrogramLoss.forward.

    spec, output_spec: (B, n_mels, T) float arrays (f32 or bf16)
    spec_length, output_spec_length: (B,) int arrays
    Returns a scalar float32 (mean absolute error).

    check_lengths=True mirrors the PyTorch RuntimeError; it forces a host sync
    (jax.device_get), so disable it in hot training loops.
    """
    if check_lengths:
        sl = np.asarray(jax.device_get(spec_length))
        osl = np.asarray(jax.device_get(output_spec_length))
        if not np.all(osl == sl):
            idx = int(np.nonzero(osl != sl)[0][0])
            raise RuntimeError(
                f"Difference in the spectrogram lengths: {int(osl[idx])} vs {int(sl[idx])}."
            )

    assert spec.shape == output_spec.shape
    return _mel_l1(spec, output_spec)


if __name__ == "__main__":
    key = jax.random.PRNGKey(0)

    def run_case(B, M, T, dtype=jnp.float32, rtol=1e-5, atol=1e-5):
        k1, k2 = jax.random.split(jax.random.fold_in(key, B * 100000 + M * 1000 + T))
        spec = jax.random.normal(k1, (B, M, T), dtype=jnp.float32).astype(dtype)
        out_spec = jax.random.normal(k2, (B, M, T), dtype=jnp.float32).astype(dtype)
        lens = jnp.full((B,), T, dtype=jnp.int32)
        loss = mel_spectrogram_loss(spec, lens, out_spec, lens)
        loss = jax.block_until_ready(loss)
        ref = jnp.mean(jnp.abs(out_spec.astype(jnp.float32) - spec.astype(jnp.float32)))
        assert jnp.allclose(loss, ref, rtol=rtol, atol=atol), (B, M, T, dtype, loss, ref)
        return loss

    # Small shape consistent with the module (batch=2, n_mels=16, frames=32).
    run_case(2, 16, 32)
    # Larger shape exercising multi-block streaming and the ragged last block.
    run_case(8, 128, 2000)
    # bf16 inputs (native bf16 diff, f32 accumulation).
    run_case(2, 80, 347, dtype=jnp.bfloat16, rtol=2e-2, atol=2e-2)

    print("KERNEL_OK")
</pallas_src>

<mosaic_0001>
module attributes {stable_mosaic.version = 11 : i64} {
  func.func @kernel(%arg0: i32, %arg1: memref<2x512xf32, #tpu.memory_space<vmem>>, %arg2: memref<2x512xf32, #tpu.memory_space<vmem>>, %arg3: memref<1x1xf32, #tpu.memory_space<vmem>>, %arg4: memref<2x512xf32, #tpu.memory_space<vmem>>) attributes {dimension_semantics = [#tpu.dimension_semantics<arbitrary>], iteration_bounds = array<i64: 1>, scalar_prefetch = 0 : i64, scratch_operands = 1 : i64, tpu.core_type = #tpu.core_type<tc>, window_params = [{transform_indices = @transform_0, window_bounds = array<i64: 2, 512>}, {transform_indices = @transform_1, window_bounds = array<i64: 2, 512>}, {pipeline_mode = #tpu.pipeline_mode<synchronous>, transform_indices = @transform_2, window_bounds = array<i64: 1, 1>}]} {
    %c0_i32 = arith.constant 0 : i32
    %0 = arith.cmpi eq, %arg0, %c0_i32 : i32
    %1 = arith.extui %0 : i1 to i32
    %c0_i32_0 = arith.constant 0 : i32
    %2 = arith.cmpi ne, %1, %c0_i32_0 : i32
    scf.if %2 {
      %cst = arith.constant 0.000000e+00 : f32
      %18 = vector.broadcast %cst : f32 to vector<2x512xf32>
      %c0_11 = arith.constant 0 : index
      %c0_12 = arith.constant 0 : index
      %19 = vector.load %arg4[%c0_11, %c0_12] : memref<2x512xf32, #tpu.memory_space<vmem>>, vector<2x512xf32>
      tpu.vector_store %arg4[%c0_11, %c0_12], %18 {strides = array<i32>} : memref<2x512xf32, #tpu.memory_space<vmem>>, vector<2x512xf32>,
    } else {
    }
    %c0 = arith.constant 0 : index
    %c0_1 = arith.constant 0 : index
    %3 = vector.load %arg2[%c0, %c0_1] : memref<2x512xf32, #tpu.memory_space<vmem>>, vector<2x512xf32>
    %c0_2 = arith.constant 0 : index
    %c0_3 = arith.constant 0 : index
    %4 = vector.load %arg1[%c0_2, %c0_3] : memref<2x512xf32, #tpu.memory_space<vmem>>, vector<2x512xf32>
    %5 = arith.subf %3, %4 : vector<2x512xf32>
    %6 = math.absf %5 : vector<2x512xf32>
    %c2_i32 = arith.constant 2 : i32
    %7 = arith.muli %arg0, %c2_i32 : i32
    %c2_i32_4 = arith.constant 2 : i32
    %8 = arith.subi %c2_i32_4, %7 : i32
    %c2_i32_5 = arith.constant 2 : i32
    %9 = arith.cmpi sge, %8, %c2_i32_5 : i32
    %10 = arith.extui %9 : i1 to i32
    %c0_i32_6 = arith.constant 0 : i32
    %11 = arith.cmpi ne, %10, %c0_i32_6 : i32
    scf.if %11 {
      %c0_11 = arith.constant 0 : index
      %c0_12 = arith.constant 0 : index
      %18 = vector.load %arg4[%c0_11, %c0_12] : memref<2x512xf32, #tpu.memory_space<vmem>>, vector<2x512xf32>
      %19 = arith.addf %18, %6 : vector<2x512xf32>
      %c0_13 = arith.constant 0 : index
      %c0_14 = arith.constant 0 : index
      %20 = vector.load %arg4[%c0_13, %c0_14] : memref<2x512xf32, #tpu.memory_space<vmem>>, vector<2x512xf32>
      tpu.vector_store %arg4[%c0_13, %c0_14], %19 {strides = array<i32>} : memref<2x512xf32, #tpu.memory_space<vmem>>, vector<2x512xf32>,
    } else {
    }
    %c2_i32_7 = arith.constant 2 : i32
    %12 = arith.cmpi slt, %8, %c2_i32_7 : i32
    %13 = arith.extui %12 : i1 to i32
    %c0_i32_8 = arith.constant 0 : i32
    %14 = arith.cmpi ne, %13, %c0_i32_8 : i32
    scf.if %14 {
      %18 = tpu.iota {dimensions = array<i32: 0>} : vector<2x512xi32>
      %c0_11 = arith.constant 0 : index
      %c0_12 = arith.constant 0 : index
      %19 = vector.load %arg4[%c0_11, %c0_12] : memref<2x512xf32, #tpu.memory_space<vmem>>, vector<2x512xf32>
      %20 = vector.broadcast %8 : i32 to vector<2x512xi32>
      %21 = arith.cmpi slt, %18, %20 : vector<2x512xi32>
      %cst = arith.constant 0.000000e+00 : f32
      %22 = vector.broadcast %cst : f32 to vector<2x512xf32>
      %23 = arith.select %21, %6, %22 : vector<2x512xi1>, vector<2x512xf32>
      %24 = arith.addf %19, %23 : vector<2x512xf32>
      %c0_13 = arith.constant 0 : index
      %c0_14 = arith.constant 0 : index
      %25 = vector.load %arg4[%c0_13, %c0_14] : memref<2x512xf32, #tpu.memory_space<vmem>>, vector<2x512xf32>
      tpu.vector_store %arg4[%c0_13, %c0_14], %24 {strides = array<i32>} : memref<2x512xf32, #tpu.memory_space<vmem>>, vector<2x512xf32>,
    } else {
    }
    %c0_i32_9 = arith.constant 0 : i32
    %15 = arith.cmpi eq, %arg0, %c0_i32_9 : i32
    %16 = arith.extui %15 : i1 to i32
    %c0_i32_10 = arith.constant 0 : i32
    %17 = arith.cmpi ne, %16, %c0_i32_10 : i32
    scf.if %17 {
      %c0_11 = arith.constant 0 : index
      %c0_12 = arith.constant 0 : index
      %18 = vector.load %arg4[%c0_11, %c0_12] : memref<2x512xf32, #tpu.memory_space<vmem>>, vector<2x512xf32>
      %cst = arith.constant dense<0.000000e+00> : vector<2xf32>
      %19 = vector.multi_reduction <add>, %18, %cst [1] : vector<2x512xf32> to vector<2xf32>
      %20 = vector.shape_cast %19 : vector<2xf32> to vector<2x1xf32>
      %cst_13 = arith.constant dense<0.000000e+00> : vector<1xf32>
      %21 = vector.multi_reduction <add>, %20, %cst_13 [0] : vector<2x1xf32> to vector<1xf32>
      %22 = vector.shape_cast %21 : vector<1xf32> to vector<1x1xf32>
      %c0_14 = arith.constant 0 : index
      %c0_15 = arith.constant 0 : index
      %23 = vector.load %arg3[%c0_14, %c0_15] : memref<1x1xf32, #tpu.memory_space<vmem>>, vector<1x1xf32>
      tpu.vector_store %arg3[%c0_14, %c0_15], %22 {strides = array<i32>} : memref<1x1xf32, #tpu.memory_space<vmem>>, vector<1x1xf32>,
    } else {
    }
    return
  }
  func.func @transform_0(%arg0: i32) -> (i32, i32) {
    %c0_i32 = arith.constant 0 : i32
    %c0_i32_0 = arith.constant 0 : i32
    return %arg0, %c0_i32 : i32, i32
  }
  func.func @transform_1(%arg0: i32) -> (i32, i32) {
    %c0_i32 = arith.constant 0 : i32
    %c0_i32_0 = arith.constant 0 : i32
    return %arg0, %c0_i32 : i32, i32
  }
  func.func @transform_2(%arg0: i32) -> (i32, i32) {
    %c0_i32 = arith.constant 0 : i32
    %c0_i32_0 = arith.constant 0 : i32
    %c0_i32_1 = arith.constant 0 : i32
    return %c0_i32, %c0_i32_0 : i32, i32
  }
}

</mosaic_0001>

<llo_original>
// kernel: _mel_l1_impl.1
$region0: #{_mel_l1_impl.1}
  #allocation0 [shape = 'u32[]', space=smem, size = 0x4, offset = 0x4, fixed_abs, tag = 'smem constant byte address 0x4 - core index']
  #allocation1 [shape = 'u32[144,128]{1,0:T(1,128)}', space=vmem, size = 0x12000, scoped, tag = 'internal scratch']
  #allocation2 [shape = 'f32[2,512]{1,0:T(2,128)}', space=vmem, size = 0x1000, scoped, tag = 'scratch operand']
  %s0 = inlined_call_operand.vmem [shape: f32[2,512], index: 0, kind: input, shape index: {}]
  %s1 = inlined_call_operand.vmem [shape: f32[2,512], index: 1, kind: input, shape index: {}]
  %s2 = inlined_call_operand.hbm [shape: f32[1,1], index: 2, kind: output, shape index: {}]
  %s3 = sld [smem:[#allocation0]]
  $region34: #{_mel_l1_impl.1} parent=0
    _
  %s5 = ssub.s32 1, %s3
  %s6 = scalar_select 0, %s5, %s3
  $region1: #{_mel_l1_impl.1} parent=0
    #allocation3 [shape = 'u8[512]{0}', space=vmem, size = 0x400, scoped, tag = 'output window, operand 0, single buffered']
    #allocation4 [shape = 's32[1]{0}', space=sflag, size = 0x4, scoped, tag = 'scoped memory for _mel_l1_impl.1']
    %7 = vsyncpa [#allocation4], 0
    // Predicated region
    $region2: #{_mel_l1_impl.1} parent=1 // pred_check
      _
    $region3: #{_mel_l1_impl.1} parent=1 // pred_check_branch
      %9 = sbr.rel (0) target = $region5
    $region4: #{_mel_l1_impl.1} parent=1 // pred_region
      _
    $region5: #{_mel_l1_impl.1} parent=1 // pred_fallthru
      _
    // Predicated region
    $region6: #{_mel_l1_impl.1} parent=1 // pred_check
      _
    $region7: #{_mel_l1_impl.1} parent=1 // pred_check_branch
      %11 = sbr.rel (0) target = $region9
    $region8: #{_mel_l1_impl.1} parent=1 // pred_region
      _
    $region9: #{_mel_l1_impl.1} parent=1 // pred_fallthru
      _
    %p12 = scmp.eq.s32.totalorder 0, 0
    // Predicated region
    $region10: #{_mel_l1_impl.1} parent=1 // pred_check
      %p13 = pneg %p12
    $region11: #{_mel_l1_impl.1} parent=1 // pred_check_branch
      %15 = sbr.rel (%p13) target = $region13
    $region12: #{_mel_l1_impl.1} parent=1 // pred_region
      %16 = vst [vmem:[#allocation2] sm:$0xff] 0.0
    $region13: #{_mel_l1_impl.1} parent=1 // pred_fallthru
      _
    %v17 = vld [vmem:[%s1] sm:$0xff]
    %v18 = vld [vmem:[%s0] sm:$0xff]
    %v19 = vsub.f32 %v17, %v18
    %v20 = vand.u32 2147483647, %v19
    %s21 = smul.u32 0, 2
    %s22 = ssub.s32 2, %s21
    %p23 = scmp.ge.s32.totalorder %s22, 2
    // Predicated region
    $region14: #{_mel_l1_impl.1} parent=1 // pred_check
      %p24 = pneg %p23
    $region15: #{_mel_l1_impl.1} parent=1 // pred_check_branch
      %26 = sbr.rel (%p24) target = $region17
    $region16: #{_mel_l1_impl.1} parent=1 // pred_region
      %v27 = vld [vmem:[#allocation2] sm:$0xff]
      %v28 = vadd.f32 %v27, %v20
      %29 = vst [vmem:[#allocation2] sm:$0xff] %v28
    $region17: #{_mel_l1_impl.1} parent=1 // pred_fallthru
      _
    %p30 = scmp.lt.s32.totalorder %s22, 2
    // Predicated region
    $region18: #{_mel_l1_impl.1} parent=1 // pred_check
      %p31 = pneg %p30
    $region19: #{_mel_l1_impl.1} parent=1 // pred_check_branch
      %33 = sbr.rel (%p31) target = $region21
    $region20: #{_mel_l1_impl.1} parent=1 // pred_region
      %v34 = vlaneseq
      %v35 = vshrl.u32 %v34, 7
      %v36 = vld [vmem:[#allocation2] sm:$0xff]
      %v37 = vstv %s22
      %vm38 = vcmp.lt.s32.totalorder %v35, %v37
      %v40 = vcombine.high %v20, %v20
      %v42 = vunpack.c.l.s4 1983009808
      %v43 = vunpack.c.0.s8 %v42
      %v44 = vlaneseq
      %v45 = vshrl.u32 %v44, 7
      %v46 = vsub.s32 %v43, %v45
      %v47 = vrot.slane %v20, %v46
      %v49 = vunpack.c.l.s4 1983009808
      %v50 = vunpack.c.0.s8 %v49
      %v51 = vlaneseq
      %v52 = vshrl.u32 %v51, 7
      %v53 = vsub.s32 %v50, %v52
      %v54 = vrot.slane %v40, %v53
      %v55 = vcombine.high %v47, %v47
      %v56 = vcombine.high %v54, %v54
      %v61 = vsel %vm38, %v47, 0.0
      %v62 = vsel %vm38, %v55, 0.0
      %v63 = vsel %vm38, %v54, 0.0
      %v64 = vsel %vm38, %v56, 0.0
      %v69 = vcombine.low %v61, %v62
      %v70 = vcombine.low %v63, %v64
      %v72 = vunpack.c.l.s4 1983009808
      %v73 = vunpack.c.0.s8 %v72
      %v74 = vlaneseq
      %v75 = vshrl.u32 %v74, 7
      %v76 = vsub.s32 %v73, %v75
      %v77 = vrot.slane %v69, %v76
      %v79 = vunpack.c.l.s4 1983009808
      %v80 = vunpack.c.0.s8 %v79
      %v81 = vlaneseq
      %v82 = vshrl.u32 %v81, 7
      %v83 = vsub.s32 %v80, %v82
      %v84 = vrot.slane %v70, %v83
      %v85 = vcombine.low %v77, %v84
      %v87 = vadd.f32 %v36, %v85
      %88 = vst [vmem:[#allocation2] sm:$0xff] %v87
    $region21: #{_mel_l1_impl.1} parent=1 // pred_fallthru
      _
    // Predicated region
    $region22: #{_mel_l1_impl.1} parent=1 // pred_check
      %p89 = pneg %p12
    $region23: #{_mel_l1_impl.1} parent=1 // pred_check_branch
      %91 = sbr.rel (%p89) target = $region25
    $region24: #{_mel_l1_impl.1} parent=1 // pred_region
      %v92 = vld [vmem:[#allocation2] sm:$0xff]
      %v94 = vcombine.high %v92, %v92
      %v96 = vunpack.c.l.s4 1983009808
      %v97 = vunpack.c.0.s8 %v96
      %v98 = vlaneseq
      %v99 = vshrl.u32 %v98, 7
      %v100 = vsub.s32 %v97, %v99
      %v101 = vrot.slane %v92, %v100
      %v103 = vunpack.c.l.s4 1983009808
      %v104 = vunpack.c.0.s8 %v103
      %v105 = vlaneseq
      %v106 = vshrl.u32 %v105, 7
      %v107 = vsub.s32 %v104, %v106
      %v108 = vrot.slane %v94, %v107
      %v109 = vcombine.high %v101, %v101
      %v110 = vcombine.high %v108, %v108
      %vm115 = vcmask 1041408
      %v116 = vsel %vm115, %v101, 0.0
      %v117 = vsel %vm115, %v109, 0.0
      %v118 = vadd.f32 %v116, %v117
      %v119 = vsel %vm115, %v108, 0.0
      %v120 = vadd.f32 %v118, %v119
      %v121 = vsel %vm115, %v110, 0.0
      %v122 = vadd.f32 %v120, %v121
      %123 = vadd.xlane.f32.xlu0 %v122
      %v124 = vpop.xlane.xlu0 %123
      %v125 = vsel %vm115, %v124, 0.0
      %v126 = vrot.slane %v125, 4
      %v127 = vadd.f32 %v125, %v126
      %v128 = vrot.slane %v127, 2
      %v129 = vadd.f32 %v127, %v128
      %v130 = vrot.slane %v129, 1
      %v131 = vadd.f32 %v129, %v130
      %vm132 = vcmask 0
      %133 = vst.msk [vmem:[#allocation3] sm:$0x1] %vm132, %v131
    $region25: #{_mel_l1_impl.1} parent=1 // pred_fallthru
      _
    // Predicated region
    $region26: #{_mel_l1_impl.1} parent=1 // pred_check
      _
    $region27: #{_mel_l1_impl.1} parent=1 // pred_check_branch
      %135 = sbr.rel (0) target = $region29
    $region28: #{_mel_l1_impl.1} parent=1 // pred_region
      %s137 = ssub.s32 16, 16
      %138 = vsyncadd [#allocation4], %s137
      %s140 = sshll.u32 [#allocation3], 4
      %s141 = int_to_ptr.vmem [resolvable:$true] %s140
      %143 = dma.vmem_to_hbm [thread:$0]  %s141, 16, %s2, [#allocation4]
    $region29: #{_mel_l1_impl.1} parent=1 // pred_fallthru
      _
    // Predicated region
    $region30: #{_mel_l1_impl.1} parent=1 // pred_check
      _
    $region31: #{_mel_l1_impl.1} parent=1 // pred_check_branch
      %145 = sbr.rel (0) target = $region33
    $region32: #{_mel_l1_impl.1} parent=1 // pred_region
      %146 = dma.done [#allocation4], 16
    $region33: #{_mel_l1_impl.1} parent=1 // pred_fallthru
      _
    %147 = vsyncpa [#allocation4], 1

</llo_original>
